<compile_context>
chip_gen: v7x
topology: tpu7x:2x2x1
jax: 0.10.0
libtpu: 0.0.40
codegen_flags: <defaults>
</compile_context>

<pallas_src>
import functools

import jax
import jax.numpy as jnp
from jax import lax
from jax.experimental import pallas as pl
from jax.experimental.pallas import tpu as pltpu

LANES = 128
SUBLANES = 8
TARGET_BLOCK_BYTES = 8 << 20      # ~8 MiB streamed per grid step (dtype-scaled rows)
VMEM_LIMIT_BYTES = 40 << 20       # 2 x 8 MiB double-buffer + output fits v7x's 64 MiB


def _num_tensorcores() -> int:
    """Best-effort TensorCores-per-chip count (2 on v7x, 1 on v5e/v6e)."""
    try:
        info = pltpu.get_tpu_info()
        for name in ("num_cores", "core_count", "num_tensorcores",
                     "tensor_core_count", "num_tensor_cores"):
            v = getattr(info, name, None)
            if isinstance(v, int) and v >= 1:
                return v
    except Exception:
        pass
    try:
        kind = jax.devices()[0].device_kind.lower()
    except Exception:
        return 1
    return 2 if ("v7" in kind or "7x" in kind) else 1


def _partial_sum_kernel(x_ref, o_ref, *, rows, chunk, two_core):
    """Accumulate lane/sublane-preserving f32 partial sums of x into o_ref (8,128)."""
    if two_core:
        c = pl.program_id(0)               # core axis (v7x: one TensorCore per value)
        i = pl.program_id(1)               # sequential row-block axis
        steps = pl.num_programs(1)
        g = c * steps + i                  # global (unclamped) row-block index
    else:
        i = pl.program_id(0)               # single-TC chips: plain 1-D grid
        g = i

    tm = x_ref.shape[0]                    # rows per block
    n_chunks = tm // chunk                 # tm % chunk == 0 by construction

    @pl.when(i == 0)
    def _init():
        o_ref[...] = jnp.zeros_like(o_ref)

    valid = rows - g * tm                  # number of real rows in this block

    def _chunk_sum(j, mask_rows):
        start = pl.multiple_of(j * chunk, chunk)
        blk = x_ref[pl.ds(start, chunk), :].astype(jnp.float32)
        if mask_rows:
            row = lax.broadcasted_iota(jnp.int32, (chunk, LANES), 0) + start
            blk = jnp.where(row < valid, blk, 0.0)
        # (chunk,128) -> (chunk//8, 8, 128): each (8,128) group is exactly one
        # f32 vreg, so this lowers to a pure vreg add tree (no VMEM copy).
        return blk.reshape(chunk // SUBLANES, SUBLANES, LANES).sum(axis=0)

    # Hot path: block fully valid -> streaming vld + vadd over chunk-row tiles.
    @pl.when(valid >= tm)
    def _full():
        acc = lax.fori_loop(0, n_chunks,
                            lambda j, a: a + _chunk_sum(j, False),
                            jnp.zeros((SUBLANES, LANES), jnp.float32))
        o_ref[...] += acc

    # Boundary block (at most one per core): mask rows past `valid`.
    @pl.when(jnp.logical_and(valid < tm, valid > 0))
    def _partial():
        acc = lax.fori_loop(0, n_chunks,
                            lambda j, a: a + _chunk_sum(j, True),
                            jnp.zeros((SUBLANES, LANES), jnp.float32))
        o_ref[...] += acc
    # valid <= 0: clamped duplicate tail block on the 2-core split -> contributes 0.


def wgan_acgan_loss(x, target=None, cond_weight: float = 1.0, *,
                    min_pallas_elems: int = 1 << 20):
    """JAX/Pallas equivalent of WGAN_ACGAN.forward: returns -x.mean().

    `target` and `cond_weight` are accepted for API parity but unused,
    exactly as in the reference PyTorch module.
    """
    del target, cond_weight  # unused in the reference forward
    n = x.size
    assert n > 0
    orig_dtype = x.dtype

    if not jnp.issubdtype(orig_dtype, jnp.floating):
        return -jnp.mean(x)

    itemsize = jnp.dtype(orig_dtype).itemsize
    pack = {1: 32, 2: 16, 4: 8}.get(itemsize, SUBLANES)   # native sublane packing

    rows_exact = n // LANES
    # Small / awkward inputs: plain XLA mean beats any kernel launch.
    if n < min_pallas_elems or rows_exact < pack:
        return -jnp.mean(x)

    # NOTE: jnp.ravel of a non-contiguous view materializes a copy in the
    # wrapper; the usual discriminator-output inputs are contiguous.
    flat = jnp.ravel(x)
    rem = n % LANES
    if rem:
        flat = jnp.pad(flat, (0, LANES - rem))   # zeros don't change the sum
    rows = flat.size // LANES
    x2d = flat.reshape(rows, LANES)              # collapse/split reshape, no HBM traffic

    # dtype-scaled ~8 MiB row blocks; blocks >= 128 rows are rounded to 128 rows,
    # which covers every packed-sublane multiple (8 f32 / 16 bf16 / 32 fp8-int8).
    target_rows = max(LANES, (TARGET_BLOCK_BYTES // (LANES * itemsize)) // LANES * LANES)
    if rows >= LANES:
        tm = min((rows // LANES) * LANES, target_rows)
    else:
        tm = (rows // pack) * pack
    chunk = min(LANES, tm)                       # divides tm by construction
    blocks_total = pl.cdiv(rows, tm)

    cores = _num_tensorcores()
    two_core = (cores >= 2) and (blocks_total >= 2)

    kernel = functools.partial(_partial_sum_kernel, rows=rows, chunk=chunk,
                               two_core=two_core)
    cost = pl.CostEstimate(
        flops=n, transcendentals=0,
        bytes_accessed=n * itemsize + (2 if two_core else 1) * SUBLANES * LANES * 4)

    if two_core:
        steps = pl.cdiv(blocks_total, 2)
        grid = (2, steps)

        def in_map(c, i):
            # Clamp so the DMA window stays in-bounds; the unclamped `valid`
            # computed in-kernel gates all compute for the duplicated tail block.
            return (jnp.minimum(c * steps + i, blocks_total - 1), 0)

        in_specs = [pl.BlockSpec((tm, LANES), in_map)]
        out_specs = pl.BlockSpec((None, SUBLANES, LANES), lambda c, i: (c, 0, 0))
        out_shape = jax.ShapeDtypeStruct((2, SUBLANES, LANES), jnp.float32)
        # v7x: make the 2-way split truly core-bound; fall back to PARALLEL.
        core_sem = getattr(pltpu, "CORE_PARALLEL", pltpu.PARALLEL)
        dim_sem = (core_sem, pltpu.ARBITRARY)
    else:
        grid = (blocks_total,)
        in_specs = [pl.BlockSpec((tm, LANES), lambda i: (i, 0))]
        out_specs = pl.BlockSpec((SUBLANES, LANES), lambda i: (0, 0))
        out_shape = jax.ShapeDtypeStruct((SUBLANES, LANES), jnp.float32)
        dim_sem = ("arbitrary",)

    partials = pl.pallas_call(
        kernel,
        out_shape=out_shape,
        grid=grid,
        in_specs=in_specs,
        out_specs=out_specs,
        compiler_params=pltpu.CompilerParams(
            dimension_semantics=dim_sem,
            vmem_limit_bytes=VMEM_LIMIT_BYTES),
        cost_estimate=cost,
    )(x2d)

    total = jnp.sum(partials)                    # tiny (<=2,8,128) reduce in XLA
    loss = -(total / n)
    return loss.astype(orig_dtype)


if __name__ == "__main__":
    key = jax.random.PRNGKey(0)
    kx, kt, k2, k3 = jax.random.split(key, 4)

    # Discriminator-sized output, matching the PyTorch module's typical use.
    x = jax.random.normal(kx, (2, 4, 16, 16), dtype=jnp.float32)
    target = jax.random.randint(kt, (2,), 0, 4)  # unused, for API parity

    # Force the Pallas path even at this small size so the kernel is exercised.
    loss = jax.block_until_ready(wgan_acgan_loss(x, target, min_pallas_elems=0))
    ref = -jnp.mean(x)
    assert jnp.allclose(loss, ref, atol=1e-5, rtol=1e-5), (loss, ref)

    # Default path: small input -> plain XLA fallback.
    loss_small = jax.block_until_ready(wgan_acgan_loss(x, target))
    assert jnp.allclose(loss_small, ref, atol=1e-6, rtol=1e-6), (loss_small, ref)

    # Multi-block f32 case: full blocks (chunked fori loop) + masked boundary block.
    x1 = jax.random.normal(k2, (3, 5, 41, 128), dtype=jnp.float32)
    loss1 = jax.block_until_ready(wgan_acgan_loss(x1, None, min_pallas_elems=0))
    ref1 = -jnp.mean(x1)
    assert jnp.allclose(loss1, ref1, atol=1e-5, rtol=1e-4), (loss1, ref1)

    # Misaligned size + bf16: exercises 128-padding, bf16 sublane packing (TM % 16 == 0),
    # on-chip upcast, and the in-kernel row mask.
    x2 = jax.random.normal(k3, (3, 5, 37, 29), dtype=jnp.bfloat16)
    loss2 = jax.block_until_ready(wgan_acgan_loss(x2, None, min_pallas_elems=0))
    ref2 = -jnp.mean(x2.astype(jnp.float32))
    assert jnp.allclose(loss2.astype(jnp.float32), ref2, atol=2e-2, rtol=2e-2), (loss2, ref2)

    print("KERNEL_OK")
</pallas_src>

<mosaic_0001>
module attributes {stable_mosaic.version = 11 : i64} {
  func.func @_partial_sum_kernel(%arg0: i32, %arg1: memref<16x128xf32, #tpu.memory_space<vmem>>, %arg2: memref<8x128xf32, #tpu.memory_space<vmem>>) attributes {dimension_semantics = [#tpu.dimension_semantics<arbitrary>], iteration_bounds = array<i64: 1>, scalar_prefetch = 0 : i64, scratch_operands = 0 : i64, tpu.core_type = #tpu.core_type<tc>, window_params = [{transform_indices = @transform_0, window_bounds = array<i64: 16, 128>}, {pipeline_mode = #tpu.pipeline_mode<synchronous>, transform_indices = @transform_1, window_bounds = array<i64: 8, 128>}]} {
    %c0_i32 = arith.constant 0 : i32
    %0 = arith.cmpi eq, %arg0, %c0_i32 : i32
    %1 = arith.extui %0 : i1 to i32
    %c0_i32_0 = arith.constant 0 : i32
    %2 = arith.cmpi ne, %1, %c0_i32_0 : i32
    scf.if %2 {
      %cst = arith.constant 0.000000e+00 : f32
      %13 = vector.broadcast %cst : f32 to vector<8x128xf32>
      %c0 = arith.constant 0 : index
      %c0_7 = arith.constant 0 : index
      %14 = vector.load %arg2[%c0, %c0_7] : memref<8x128xf32, #tpu.memory_space<vmem>>, vector<8x128xf32>
      tpu.vector_store %arg2[%c0, %c0_7], %13 {strides = array<i32>} : memref<8x128xf32, #tpu.memory_space<vmem>>, vector<8x128xf32>,
    } else {
    }
    %c16_i32 = arith.constant 16 : i32
    %3 = arith.muli %arg0, %c16_i32 : i32
    %c16_i32_1 = arith.constant 16 : i32
    %4 = arith.subi %c16_i32_1, %3 : i32
    %c16_i32_2 = arith.constant 16 : i32
    %5 = arith.cmpi sge, %4, %c16_i32_2 : i32
    %6 = arith.extui %5 : i1 to i32
    %c0_i32_3 = arith.constant 0 : i32
    %7 = arith.cmpi ne, %6, %c0_i32_3 : i32
    scf.if %7 {
      %cst = arith.constant 0.000000e+00 : f32
      %13 = vector.broadcast %cst : f32 to vector<8x128xf32>
      %c0_i32_7 = arith.constant 0 : i32
      %c16_i32_8 = arith.constant 16 : i32
      %14 = arith.muli %c0_i32_7, %c16_i32_8 : i32
      %15 = tpu.assume_multiple %14, 16 : i32
      %16 = arith.index_cast %15 : i32 to index
      %c0 = arith.constant 0 : index
      %17 = vector.load %arg1[%16, %c0] : memref<16x128xf32, #tpu.memory_space<vmem>>, vector<16x128xf32>
      %18 = vector.shape_cast %17 : vector<16x128xf32> to vector<2x8x128xf32>
      %cst_9 = arith.constant dense<0.000000e+00> : vector<8x128xf32>
      %19 = vector.multi_reduction <add>, %18, %cst_9 [0] : vector<2x8x128xf32> to vector<8x128xf32>
      %20 = arith.addf %13, %19 : vector<8x128xf32>
      %c1_i32 = arith.constant 1 : i32
      %c0_10 = arith.constant 0 : index
      %c0_11 = arith.constant 0 : index
      %21 = vector.load %arg2[%c0_10, %c0_11] : memref<8x128xf32, #tpu.memory_space<vmem>>, vector<8x128xf32>
      %22 = arith.addf %21, %20 : vector<8x128xf32>
      %c0_12 = arith.constant 0 : index
      %c0_13 = arith.constant 0 : index
      %23 = vector.load %arg2[%c0_12, %c0_13] : memref<8x128xf32, #tpu.memory_space<vmem>>, vector<8x128xf32>
      tpu.vector_store %arg2[%c0_12, %c0_13], %22 {strides = array<i32>} : memref<8x128xf32, #tpu.memory_space<vmem>>, vector<8x128xf32>,
    } else {
    }
    %c16_i32_4 = arith.constant 16 : i32
    %8 = arith.cmpi slt, %4, %c16_i32_4 : i32
    %c0_i32_5 = arith.constant 0 : i32
    %9 = arith.cmpi sgt, %4, %c0_i32_5 : i32
    %10 = arith.andi %8, %9 : i1
    %11 = arith.extui %10 : i1 to i32
    %c0_i32_6 = arith.constant 0 : i32
    %12 = arith.cmpi ne, %11, %c0_i32_6 : i32
    scf.if %12 {
      %cst = arith.constant 0.000000e+00 : f32
      %13 = vector.broadcast %cst : f32 to vector<8x128xf32>
      %c0_i32_7 = arith.constant 0 : i32
      %c16_i32_8 = arith.constant 16 : i32
      %14 = arith.muli %c0_i32_7, %c16_i32_8 : i32
      %15 = tpu.assume_multiple %14, 16 : i32
      %16 = arith.index_cast %15 : i32 to index
      %c0 = arith.constant 0 : index
      %17 = vector.load %arg1[%16, %c0] : memref<16x128xf32, #tpu.memory_space<vmem>>, vector<16x128xf32>
      %18 = tpu.iota {dimensions = array<i32: 0>} : vector<16x128xi32>
      %19 = vector.broadcast %15 : i32 to vector<16x128xi32>
      %20 = arith.addi %18, %19 : vector<16x128xi32>
      %21 = vector.broadcast %4 : i32 to vector<16x128xi32>
      %22 = arith.cmpi slt, %20, %21 : vector<16x128xi32>
      %cst_9 = arith.constant 0.000000e+00 : f32
      %23 = vector.broadcast %cst_9 : f32 to vector<16x128xf32>
      %24 = arith.select %22, %17, %23 : vector<16x128xi1>, vector<16x128xf32>
      %25 = vector.shape_cast %24 : vector<16x128xf32> to vector<2x8x128xf32>
      %cst_10 = arith.constant dense<0.000000e+00> : vector<8x128xf32>
      %26 = vector.multi_reduction <add>, %25, %cst_10 [0] : vector<2x8x128xf32> to vector<8x128xf32>
      %27 = arith.addf %13, %26 : vector<8x128xf32>
      %c1_i32 = arith.constant 1 : i32
      %c0_11 = arith.constant 0 : index
      %c0_12 = arith.constant 0 : index
      %28 = vector.load %arg2[%c0_11, %c0_12] : memref<8x128xf32, #tpu.memory_space<vmem>>, vector<8x128xf32>
      %29 = arith.addf %28, %27 : vector<8x128xf32>
      %c0_13 = arith.constant 0 : index
      %c0_14 = arith.constant 0 : index
      %30 = vector.load %arg2[%c0_13, %c0_14] : memref<8x128xf32, #tpu.memory_space<vmem>>, vector<8x128xf32>
      tpu.vector_store %arg2[%c0_13, %c0_14], %29 {strides = array<i32>} : memref<8x128xf32, #tpu.memory_space<vmem>>, vector<8x128xf32>,
    } else {
    }
    return
  }
  func.func @transform_0(%arg0: i32) -> (i32, i32) {
    %c0_i32 = arith.constant 0 : i32
    %c0_i32_0 = arith.constant 0 : i32
    return %arg0, %c0_i32 : i32, i32
  }
  func.func @transform_1(%arg0: i32) -> (i32, i32) {
    %c0_i32 = arith.constant 0 : i32
    %c0_i32_0 = arith.constant 0 : i32
    %c0_i32_1 = arith.constant 0 : i32
    return %c0_i32, %c0_i32_0 : i32, i32
  }
}

</mosaic_0001>

<llo_original>
// kernel: tpu_custom_call.1
$region0: #{tpu_custom_call.1}
  #allocation0 [shape = 'u32[]', space=smem, size = 0x4, offset = 0x4, fixed_abs, tag = 'smem constant byte address 0x4 - core index']
  #allocation1 [shape = 'u32[144,128]{1,0:T(1,128)}', space=vmem, size = 0x12000, scoped, tag = 'internal scratch']
  %s0 = inlined_call_operand.hbm [shape: f32[16,128], index: 0, kind: input, shape index: {}]
  %s1 = inlined_call_operand.hbm [shape: f32[8,128], index: 1, kind: output, shape index: {}]
  %s2 = sld [smem:[#allocation0]]
  $region30: #{tpu_custom_call.1} parent=0
    _
  %s4 = ssub.s32 1, %s2
  %s5 = scalar_select 0, %s4, %s2
  $region1: #{tpu_custom_call.1} parent=0
    #allocation2 [shape = 'u8[8192]{0}', space=vmem, size = 0x2000, scoped, tag = 'input window, operand 0, single buffered']
    #allocation3 [shape = 's32[1]{0}', space=sflag, size = 0x4, scoped, tag = 'scoped memory for tpu_custom_call.1']
    #allocation4 [shape = 's32[1]{0}', space=sflag, size = 0x4, scoped, tag = 'scoped memory for tpu_custom_call.1']
    #allocation5 [shape = 'u8[4096]{0}', space=vmem, size = 0x1000, scoped, tag = 'output window, operand 0, single buffered']
    %6 = vsyncpa [#allocation3], 0
    %7 = vsyncpa [#allocation4], 0
    // Predicated region
    $region2: #{tpu_custom_call.1} parent=1 // pred_check
      _
    $region3: #{tpu_custom_call.1} parent=1 // pred_check_branch
      %9 = sbr.rel (0) target = $region5
    $region4: #{tpu_custom_call.1} parent=1 // pred_region
      %s11 = ssub.s32 256, 256
      %12 = vsyncadd [#allocation3], %s11
      %s13 = sshll.u32 [#allocation2], 4
      %s14 = int_to_ptr.vmem [resolvable:$true] %s13
      %19 = dma.hbm_to_vmem [thread:$0]  %s0, 256, %s14, [#allocation3], 128, 128, 8
    $region5: #{tpu_custom_call.1} parent=1 // pred_fallthru
      _
    // Predicated region
    $region6: #{tpu_custom_call.1} parent=1 // pred_check
      _
    $region7: #{tpu_custom_call.1} parent=1 // pred_check_branch
      %21 = sbr.rel (0) target = $region9
    $region8: #{tpu_custom_call.1} parent=1 // pred_region
      %22 = dma.done [#allocation3], 256
    $region9: #{tpu_custom_call.1} parent=1 // pred_fallthru
      _
    %p23 = scmp.eq.s32.totalorder 0, 0
    // Predicated region
    $region10: #{tpu_custom_call.1} parent=1 // pred_check
      %p24 = pneg %p23
    $region11: #{tpu_custom_call.1} parent=1 // pred_check_branch
      %26 = sbr.rel (%p24) target = $region13
    $region12: #{tpu_custom_call.1} parent=1 // pred_region
      %27 = vst [vmem:[#allocation5] sm:$0xff] 0.0
    $region13: #{tpu_custom_call.1} parent=1 // pred_fallthru
      _
    %s28 = smul.u32 0, 16
    %s29 = ssub.s32 16, %s28
    %p30 = scmp.ge.s32.totalorder %s29, 16
    // Predicated region
    $region14: #{tpu_custom_call.1} parent=1 // pred_check
      %p31 = pneg %p30
    $region15: #{tpu_custom_call.1} parent=1 // pred_check_branch
      %33 = sbr.rel (%p31) target = $region17
    $region16: #{tpu_custom_call.1} parent=1 // pred_region
      %v34 = vld [vmem:[#allocation2] sm:$0xff]
      %v35 = vld [vmem:[#allocation2 + $0x8] sm:$0xff]
      %v36 = vadd.f32 %v34, %v35
      %v37 = vadd.f32 %v36, 0.0
      %v38 = vld [vmem:[#allocation5] sm:$0xff]
      %v39 = vadd.f32 %v38, %v37
      %40 = vst [vmem:[#allocation5] sm:$0xff] %v39
    $region17: #{tpu_custom_call.1} parent=1 // pred_fallthru
      _
    %p41 = scmp.lt.s32.totalorder %s29, 16
    %p42 = scmp.gt.s32.totalorder %s29, 0
    %p43 = pnand %p41, %p42
    %p44 = pneg %p43
    // Predicated region
    $region18: #{tpu_custom_call.1} parent=1 // pred_check
      _
    $region19: #{tpu_custom_call.1} parent=1 // pred_check_branch
      %46 = sbr.rel (%p43) target = $region21
    $region20: #{tpu_custom_call.1} parent=1 // pred_region
      %v47 = vld [vmem:[#allocation2] sm:$0xff]
      %v48 = vld [vmem:[#allocation2 + $0x8] sm:$0xff]
      %v49 = vlaneseq
      %v50 = vshrl.u32 %v49, 7
      %v51 = vadd.s32 %v50, 8
      %v52 = vstv 0
      %v53 = vadd.s32 %v50, %v52
      %v54 = vadd.s32 %v51, %v52
      %v55 = vstv %s29
      %vm56 = vcmp.lt.s32.totalorder %v53, %v55
      %vm57 = vcmp.lt.s32.totalorder %v54, %v55
      %v58 = vsel %vm56, %v47, 0.0
      %v59 = vsel %vm57, %v48, 0.0
      %v60 = vadd.f32 %v58, %v59
      %v61 = vadd.f32 %v60, 0.0
      %v62 = vld [vmem:[#allocation5] sm:$0xff]
      %v63 = vadd.f32 %v62, %v61
      %64 = vst [vmem:[#allocation5] sm:$0xff] %v63
    $region21: #{tpu_custom_call.1} parent=1 // pred_fallthru
      _
    // Predicated region
    $region22: #{tpu_custom_call.1} parent=1 // pred_check
      _
    $region23: #{tpu_custom_call.1} parent=1 // pred_check_branch
      %66 = sbr.rel (0) target = $region25
    $region24: #{tpu_custom_call.1} parent=1 // pred_region
      %s68 = ssub.s32 128, 128
      %69 = vsyncadd [#allocation4], %s68
      %s71 = sshll.u32 [#allocation5], 4
      %s72 = int_to_ptr.vmem [resolvable:$true] %s71
      %74 = dma.vmem_to_hbm [thread:$0]  %s72, 128, %s1, [#allocation4]
    $region25: #{tpu_custom_call.1} parent=1 // pred_fallthru
      _
    // Predicated region
    $region26: #{tpu_custom_call.1} parent=1 // pred_check
      _
    $region27: #{tpu_custom_call.1} parent=1 // pred_check_branch
      %76 = sbr.rel (0) target = $region29
    $region28: #{tpu_custom_call.1} parent=1 // pred_region
      %77 = dma.done [#allocation4], 128
    $region29: #{tpu_custom_call.1} parent=1 // pred_fallthru
      _
    %78 = vsyncpa [#allocation3], 1
    %79 = vsyncpa [#allocation4], 1

</llo_original>
